<compile_context>
chip_gen: v5e
topology: v5e:2x2
jax: 0.10.0
libtpu: 0.0.40
codegen_flags: <defaults>
</compile_context>

<pallas_src>
import math

import jax
import jax.numpy as jnp
from jax.experimental import pallas as pl
from jax.experimental.pallas import tpu as pltpu


def _round_up(a, b):
    return (a + b - 1) // b * b


def _cdiv(a, b):
    return (a + b - 1) // b


def _spectrum_kernel(w_ref, x_ref, o_ref):
    """out = relu(filter) * spectrum, re/im interleaved along the lane axis.

    w_ref : (1, TN)   interleaved (repeated x2) frequency-filter tile
    x_ref : (TB, TN)  interleaved re/im spectrum tile (batch rows)
    o_ref : (TB, TN)  aliased with x's HBM buffer (in-place multiply)
    """
    # Single vmul + vmax; kernel is HBM/DMA-bound, body is not the bottleneck.
    o_ref[...] = x_ref[...] * jnp.maximum(w_ref[...], jnp.float32(0.0))


def _vmem_limit_bytes():
    """Scoped-VMEM budget per chip generation.

    v5e/v6e have 128 MiB physical VMEM -> raise the scoped limit to 64 MiB and
    use bigger tiles (fewer ~600-cycle grid steps). v7x has only 64 MiB per
    TensorCore (and unknown chips default here too) -> stay at 32 MiB.
    """
    try:
        kind = jax.devices()[0].device_kind.lower()
    except Exception:  # pragma: no cover - defensive
        kind = ""
    if ("v5" in kind) or ("v6" in kind):
        return 64 * 1024 * 1024
    return 32 * 1024 * 1024


def _complex_to_interleaved(z):
    """complex64 (...,) -> float32 (..., 2) [re, im], preferring a free bitcast."""
    try:
        return jax.lax.bitcast_convert_type(z, jnp.float32)
    except (TypeError, ValueError):
        # TODO(synk): this JAX version rejects complex bitcasts; fall back to an
        # explicit (XLA-fusible) re/im pack.
        return jnp.stack([jnp.real(z), jnp.imag(z)], axis=-1)


def _interleaved_to_complex(r):
    """float32 (..., 2) [re, im] -> complex64 (...,), preferring a free bitcast."""
    try:
        return jax.lax.bitcast_convert_type(r, jnp.complex64)
    except (TypeError, ValueError):
        return jax.lax.complex(r[..., 0], r[..., 1])


@jax.jit
def adaptive_layer_spectrum(x, frequency_filter):
    """Equivalent of AdaptiveLayer(size=x.shape[1:], adjustment='spectrum')(x)."""
    orig_dtype = x.dtype
    B = x.shape[0]
    dims = tuple(range(1, x.ndim))                          # transformed dims (1..)

    rft = jnp.fft.rfftn(x.astype(jnp.float32), axes=dims)   # complex64 (B, C, H, Wf)
    freq_shape = rft.shape[1:]                               # (C, H, Wf)
    n = 2 * math.prod(freq_shape)                            # interleaved re/im length

    # --- pack spectrum into one lane-dense f32 stream: (B, n) ---------------
    flat = _complex_to_interleaved(rft).reshape(B, n)

    # Filter interleaved the same way: w0, w0, w1, w1, ... (ReLU done in-kernel)
    w_flat = frequency_filter.astype(jnp.float32).reshape(-1)
    w_ri = jnp.stack([w_flat, w_flat], axis=-1).reshape(1, n)

    # --- tile sizing ----------------------------------------------------------
    # Batch tiles: full batch if small (block dim == full array dim is legal for
    # the sublane axis); 128-row blocks (multiple of 8) for large B so per-buffer
    # VMEM stays constant and the grid gains points for v7x's 2 TensorCores.
    tb = B if B <= 128 else 128
    rows_padded = _round_up(tb, 8)          # VMEM sublane padding of a (tb, tn) block

    vmem_limit = _vmem_limit_bytes()
    # Bytes per lane column of the pipelined buffers, all f32, double-buffered:
    #   x tile (rows_padded sublanes) + out tile (rows_padded) + filter tile
    #   (a (1, tn) block still occupies 8 sublanes in VMEM).
    bytes_per_lane = 4 * (2 * rows_padded + 8)
    budget = (vmem_limit * 3) // 4          # ~25% headroom under the scoped limit
    tn_target = max(128, (budget // (2 * bytes_per_lane)) // 128 * 128)

    n_pad_min = _round_up(n, 128)
    # Guarantee >= 2 lane tiles whenever possible so dimension_semantics
    # "parallel" can spread work across both v7x TensorCores.
    if n_pad_min > 128:
        tn_target = min(tn_target, _round_up(_cdiv(n_pad_min, 2), 128))
    num_lane_tiles = _cdiv(n_pad_min, tn_target)
    tn = _round_up(_cdiv(n_pad_min, num_lane_tiles), 128)    # <= tn_target
    num_lane_tiles = _cdiv(n, tn)            # last tile may overhang; no padding
    num_batch_tiles = _cdiv(B, tb)

    # No jnp.pad / output slice: output shape is exactly (B, n). The overhanging
    # lanes of the last tile read undefined data (elementwise, never used) and
    # their writes are discarded. Do NOT add reductions over the lane axis here.
    out = pl.pallas_call(
        _spectrum_kernel,
        out_shape=jax.ShapeDtypeStruct((B, n), jnp.float32),
        grid=(num_batch_tiles, num_lane_tiles),
        in_specs=[
            # Filter tile: same lane index_map as x; VMEM cost tracks the tile.
            pl.BlockSpec((1, tn), lambda b, j: (0, j)),
            # Spectrum tile: one batch block x one lane tile per grid step.
            pl.BlockSpec((tb, tn), lambda b, j: (b, j)),
        ],
        out_specs=pl.BlockSpec((tb, tn), lambda b, j: (b, j)),
        # In-place multiply: donate the packed spectrum buffer to the output.
        input_output_aliases={1: 0},
        compiler_params=pltpu.CompilerParams(
            dimension_semantics=("parallel", "parallel"),
            vmem_limit_bytes=vmem_limit,
        ),
    )(w_ri, flat)

    # --- unpack, recombine and inverse transform -----------------------------
    adjusted = _interleaved_to_complex(out.reshape((B,) + freq_shape + (2,)))
    # Pass s explicitly so the output spatial shape always matches x.
    y = jnp.fft.irfftn(adjusted, s=x.shape[1:], axes=dims)
    return y.astype(orig_dtype)


if __name__ == "__main__":
    # size = (C, H, W) = (4, 16, 16); batch = 2  -> x: (2, 4, 16, 16)
    B, C, H, W = 2, 4, 16, 16
    Wf = W // 2 + 1

    key = jax.random.PRNGKey(0)
    x = jax.random.normal(key, (B, C, H, W), dtype=jnp.float32)

    # Deterministic parameter init per AdaptiveLayer.__init__ ('spectrum' -> ones)
    frequency_filter = jnp.ones((C, H, Wf), dtype=jnp.float32)

    y = adaptive_layer_spectrum(x, frequency_filter)
    y = jax.block_until_ready(y)

    # Sanity: with an all-ones filter, spectrum adjustment is the identity,
    # so irfftn(rfftn(x)) ~= x.
    assert y.shape == x.shape
    assert y.dtype == x.dtype
    assert jnp.max(jnp.abs(y - x)) < 1e-3

    print("KERNEL_OK")
</pallas_src>

<mosaic_0001>
module attributes {stable_mosaic.version = 11 : i64} {
  func.func @_spectrum_kernel(%arg0: i32, %arg1: i32, %arg2: memref<1x640xf32, #tpu.memory_space<vmem>>, %arg3: memref<2x640xf32, #tpu.memory_space<vmem>>, %arg4: memref<2x640xf32, #tpu.memory_space<vmem>>) attributes {dimension_semantics = [#tpu.dimension_semantics<parallel>, #tpu.dimension_semantics<parallel>], iteration_bounds = array<i64: 1, 2>, scalar_prefetch = 0 : i64, scratch_operands = 0 : i64, tpu.core_type = #tpu.core_type<tc>, window_params = [{transform_indices = @transform_0, window_bounds = array<i64: 1, 640>}, {transform_indices = @transform_1, window_bounds = array<i64: 2, 640>}, {transform_indices = @transform_2, window_bounds = array<i64: 2, 640>}]} {
    %c0 = arith.constant 0 : index
    %c0_0 = arith.constant 0 : index
    %0 = vector.load %arg3[%c0, %c0_0] : memref<2x640xf32, #tpu.memory_space<vmem>>, vector<2x640xf32>
    %c0_1 = arith.constant 0 : index
    %c0_2 = arith.constant 0 : index
    %1 = vector.load %arg2[%c0_1, %c0_2] : memref<1x640xf32, #tpu.memory_space<vmem>>, vector<1x640xf32>
    %cst = arith.constant 0.000000e+00 : f32
    %2 = vector.broadcast %cst : f32 to vector<1x640xf32>
    %3 = arith.maximumf %1, %2 : vector<1x640xf32>
    %4 = vector.broadcast %3 : vector<1x640xf32> to vector<2x640xf32>
    %5 = arith.mulf %0, %4 : vector<2x640xf32>
    %c0_3 = arith.constant 0 : index
    %c0_4 = arith.constant 0 : index
    %6 = vector.load %arg4[%c0_3, %c0_4] : memref<2x640xf32, #tpu.memory_space<vmem>>, vector<2x640xf32>
    tpu.vector_store %arg4[%c0_3, %c0_4], %5 {strides = array<i32>} : memref<2x640xf32, #tpu.memory_space<vmem>>, vector<2x640xf32>,
    return
  }
  func.func @transform_0(%arg0: i32, %arg1: i32) -> (i32, i32) {
    %c0_i32 = arith.constant 0 : i32
    %c0_i32_0 = arith.constant 0 : i32
    return %c0_i32, %arg1 : i32, i32
  }
  func.func @transform_1(%arg0: i32, %arg1: i32) -> (i32, i32) {
    %c0_i32 = arith.constant 0 : i32
    return %arg0, %arg1 : i32, i32
  }
  func.func @transform_2(%arg0: i32, %arg1: i32) -> (i32, i32) {
    %c0_i32 = arith.constant 0 : i32
    return %arg0, %arg1 : i32, i32
  }
}

</mosaic_0001>

<llo_original>
// kernel: adaptive_layer_spectrum.1
$region0: #{adaptive_layer_spectrum.1}
  #allocation0 [shape = 'u32[]', space=smem, size = 0x4, offset = 0x4, fixed_abs, tag = 'smem constant byte address 0x4 - core index']
  #allocation1 [shape = 'u32[72,128]{1,0:T(1,128)}', space=vmem, size = 0x9000, scoped, tag = 'internal scratch']
  %s0 = inlined_call_operand.vmem [shape: f32[1,1152], index: 0, kind: input, shape index: {}]
  %s1 = inlined_call_operand.vmem [shape: f32[2,1152], index: 1, kind: input, shape index: {}, may-alias: {1,2}]
  %s2 = inlined_call_operand.vmem [shape: f32[2,1152], index: 2, kind: output, shape index: {}, may-alias: {1,2}]
  %s3 = sld [smem:[#allocation0]]
  $region103: #{adaptive_layer_spectrum.1} parent=0
    _
  %s5 = ssub.s32 1, %s3
  %s6 = scalar_select 0, %s5, %s3
  $region1: #{adaptive_layer_spectrum.1} parent=0
    #allocation2 [shape = 'u8[10240]{0}', space=vmem, size = 0x2800, scoped, tag = 'output window, operand 0']
    loop: start=0, step=1, limit=4
    $region2: #{adaptive_layer_spectrum.1} parent=1 // loop_pre_header
      _
    $region3: #{adaptive_layer_spectrum.1} parent=1 // loop_header
      %s8 = sphi 0, %s12
      %p9 = scmp.ge.s32.totalorder %s8, 4
      %s15 = sphi 0, %s27
      %s16 = sphi 0, %s23
      %s17 = sphi 0, %s15
      %s18 = sphi 0, %s16
      %s19 = sphi 0, %s17
      %s20 = sphi 0, %s18
      %s30 = sphi 0, %s32
      %s33 = sphi 0, %s30
      %s34 = sphi 0, %s33
      %s50 = sphi 0, %s34
      %s58 = sphi 0, %s60
      %s61 = sphi 0, %s58
      %s62 = sphi 0, %s61
      %s78 = sphi 0, %s62
      %s86 = sphi 0, %s88
      %s89 = sphi 0, %s86
      %s90 = sphi 0, %s89
      %s106 = sphi 0, %s90
    $region4: #{adaptive_layer_spectrum.1} parent=1 // loop_header_branch
      %11 = sbr.rel (%p9) target = $region8
    $region5: #{adaptive_layer_spectrum.1} parent=1 // loop_body
      %s13 = ssub.s32 %s8, 1
      %s14 = ssub.s32 %s8, 2
      %s21 = sadd.s32 1, %s16
      %p22 = scmp.ge.s32.totalorder %s21, 2
      %s23 = scalar_select %p22, 0, %s21
      %s24 = sadd.s32 1, %s15
      %s25 = scalar_select %p22, %s24, %s15
      %p26 = scmp.ge.s32.totalorder %s25, 1
      %s27 = scalar_select %p26, 0, %s25
      %s28 = ssub.s32 %s16, %s23
      %p29 = scmp.eq.s32.totalorder %s28, 0
      %s31 = sadd.s32 %s30, 1
      %s32 = scalar_select %p29, %s30, %s31
      %p35 = pneg %p29
      %p36 = scmp.eq.s32.totalorder %s8, 1
      %p37 = por %p35, %p36
      %p38 = scmp.ne.s32.totalorder %s30, %s33
      %p39 = scmp.eq.s32.totalorder %s8, 0
      %p40 = por %p38, %p39
      %p41 = scmp.ne.s32.totalorder %s30, %s33
      %p42 = scmp.eq.s32.totalorder %s13, 1
      %p43 = por %p41, %p42
      %p44 = scmp.ne.s32.totalorder %s33, %s34
      %p45 = scmp.eq.s32.totalorder %s13, 0
      %p46 = por %p44, %p45
      %p47 = scmp.ne.s32.totalorder %s33, %s34
      %p48 = scmp.eq.s32.totalorder %s14, 1
      %p49 = por %p47, %p48
      %p51 = scmp.ne.s32.totalorder %s34, %s50
      %p52 = scmp.eq.s32.totalorder %s14, 0
      %p53 = por %p51, %p52
      %s54 = ssub.s32 %s15, %s27
      %s55 = ssub.s32 %s16, %s23
      %s56 = sor.u32 %s54, %s55
      %p57 = scmp.eq.s32.totalorder %s56, 0
      %s59 = sadd.s32 %s58, 1
      %s60 = scalar_select %p57, %s58, %s59
      %p63 = pneg %p57
      %p64 = scmp.eq.s32.totalorder %s8, 1
      %p65 = por %p63, %p64
      %p66 = scmp.ne.s32.totalorder %s58, %s61
      %p67 = scmp.eq.s32.totalorder %s8, 0
      %p68 = por %p66, %p67
      %p69 = scmp.ne.s32.totalorder %s58, %s61
      %p70 = scmp.eq.s32.totalorder %s13, 1
      %p71 = por %p69, %p70
      %p72 = scmp.ne.s32.totalorder %s61, %s62
      %p73 = scmp.eq.s32.totalorder %s13, 0
      %p74 = por %p72, %p73
      %p75 = scmp.ne.s32.totalorder %s61, %s62
      %p76 = scmp.eq.s32.totalorder %s14, 1
      %p77 = por %p75, %p76
      %p79 = scmp.ne.s32.totalorder %s62, %s78
      %p80 = scmp.eq.s32.totalorder %s14, 0
      %p81 = por %p79, %p80
      %s82 = ssub.s32 %s15, %s27
      %s83 = ssub.s32 %s16, %s23
      %s84 = sor.u32 %s82, %s83
      %p85 = scmp.eq.s32.totalorder %s84, 0
      %s87 = sadd.s32 %s86, 1
      %s88 = scalar_select %p85, %s86, %s87
      %p91 = pneg %p85
      %p92 = scmp.eq.s32.totalorder %s8, 1
      %p93 = por %p91, %p92
      %p94 = scmp.ne.s32.totalorder %s86, %s89
      %p95 = scmp.eq.s32.totalorder %s8, 0
      %p96 = por %p94, %p95
      %p97 = scmp.ne.s32.totalorder %s86, %s89
      %p98 = scmp.eq.s32.totalorder %s13, 1
      %p99 = por %p97, %p98
      %p100 = scmp.ne.s32.totalorder %s89, %s90
      %p101 = scmp.eq.s32.totalorder %s13, 0
      %p102 = por %p100, %p101
      %p103 = scmp.ne.s32.totalorder %s89, %s90
      %p104 = scmp.eq.s32.totalorder %s14, 1
      %p105 = por %p103, %p104
      %p107 = scmp.ne.s32.totalorder %s90, %s106
      %p108 = scmp.eq.s32.totalorder %s14, 0
      %p109 = por %p107, %p108
      %p110 = scmp.le.s32.totalorder 1, %s8
      %p111 = scmp.lt.s32.totalorder %s8, 3
      %p112 = pnand %p110, %p111
      %p113 = pneg %p112
      // Predicated region
      $region9: #{adaptive_layer_spectrum.1} parent=5 // pred_check
        _
      $region10: #{adaptive_layer_spectrum.1} parent=5 // pred_check_branch
        %115 = sbr.rel (%p112) target = $region12
      $region11: #{adaptive_layer_spectrum.1} parent=5 // pred_region
        %s116 = ssub.s32 %s8, 1
      $region12: #{adaptive_layer_spectrum.1} parent=5 // pred_fallthru
        _
      %p117 = scmp.lt.s32.totalorder %s8, 2
      // Predicated region
      $region13: #{adaptive_layer_spectrum.1} parent=5 // pred_check
        %p118 = pneg %p117
      $region14: #{adaptive_layer_spectrum.1} parent=5 // pred_check_branch
        %120 = sbr.rel (%p118) target = $region16
      $region15: #{adaptive_layer_spectrum.1} parent=5 // pred_region
        // Predicated region
        $region17: #{adaptive_layer_spectrum.1} parent=15 // pred_check
          %p121 = pneg %p40
        $region18: #{adaptive_layer_spectrum.1} parent=15 // pred_check_branch
          %123 = sbr.rel (%p121) target = $region20
        $region19: #{adaptive_layer_spectrum.1} parent=15 // pred_region
          %s124 = smul.u32 5, %s16
          %s125 = ssub.s32 9, %s124
          %p126 = scmp.lt.s32.totalorder %s125, 5
          %s127 = scalar_select %p126, %s125, 5
          %p128 = scmp.lt.s32.totalorder %s124, 8
          %s129 = scalar_select %p128, %s124, 8
          %s130 = scalar_lea.vmem %s0, %s129
          %s131 = smul.u32 5, %s16
          %s132 = ssub.s32 9, %s131
          %p133 = scmp.lt.s32.totalorder %s132, 5
          %s134 = scalar_select %p133, %s132, 5
        $region20: #{adaptive_layer_spectrum.1} parent=15 // pred_fallthru
          _
        // Predicated region
        $region21: #{adaptive_layer_spectrum.1} parent=15 // pred_check
          %p135 = pneg %p68
        $region22: #{adaptive_layer_spectrum.1} parent=15 // pred_check_branch
          %137 = sbr.rel (%p135) target = $region24
        $region23: #{adaptive_layer_spectrum.1} parent=15 // pred_region
          %s138 = smul.u32 5, %s16
          %s139 = ssub.s32 9, %s138
          %p140 = scmp.lt.s32.totalorder %s139, 5
          %s141 = scalar_select %p140, %s139, 5
          %s142 = smul.u32 2, %s141
          %p143 = scmp.lt.s32.totalorder %s15, 0
          %s144 = scalar_select %p143, %s15, 0
          %p145 = scmp.lt.s32.totalorder %s138, 8
          %s146 = scalar_select %p145, %s138, 8
          %s147 = smul.addr %s144, 9
          %s148 = sadd.s32 %s146, %s147
          %s149 = smul.addr %s148, 2
          %s150 = scalar_lea.vmem %s1, %s149
          %s151 = smul.u32 5, %s16
          %s152 = ssub.s32 9, %s151
          %p153 = scmp.lt.s32.totalorder %s152, 5
          %s154 = scalar_select %p153, %s152, 5
          %s155 = smul.u32 2, %s154
        $region24: #{adaptive_layer_spectrum.1} parent=15 // pred_fallthru
          _
      $region16: #{adaptive_layer_spectrum.1} parent=5 // pred_fallthru
        _
      %p156 = scmp.le.s32.totalorder 1, %s8
      %p157 = scmp.lt.s32.totalorder %s8, 3
      %p158 = pnand %p156, %p157
      %p159 = pneg %p158
      // Predicated region
      $region25: #{adaptive_layer_spectrum.1} parent=5 // pred_check
        _
      $region26: #{adaptive_layer_spectrum.1} parent=5 // pred_check_branch
        %161 = sbr.rel (%p158) target = $region28
      $region27: #{adaptive_layer_spectrum.1} parent=5 // pred_region
        %s162 = ssub.s32 %s8, 1
        %s163 = smul.u32 5, %s18
        %s164 = ssub.s32 9, %s163
        %p165 = scmp.lt.s32.totalorder %s164, 5
        %s166 = scalar_select %p165, %s164, 5
        %p167 = scmp.lt.s32.totalorder %s163, 8
        %s168 = scalar_select %p167, %s163, 8
        %s169 = scalar_lea.vmem %s0, %s168
        %p170 = pneg %p46
        %p171 = pneg %p43
        %s172 = smul.u32 5, %s18
        %s173 = ssub.s32 9, %s172
        %p174 = scmp.lt.s32.totalorder %s173, 5
        %s175 = scalar_select %p174, %s173, 5
        %s176 = smul.u32 2, %s175
        %p177 = scmp.lt.s32.totalorder %s17, 0
        %s178 = scalar_select %p177, %s17, 0
        %p179 = scmp.lt.s32.totalorder %s172, 8
        %s180 = scalar_select %p179, %s172, 8
        %s181 = smul.addr %s178, 9
        %s182 = sadd.s32 %s180, %s181
        %s183 = smul.addr %s182, 2
        %s184 = scalar_lea.vmem %s1, %s183
        %p185 = pneg %p74
        %p186 = pneg %p71
        %p187 = pneg %p102
        %p188 = pneg %p99
        %s189 = sand.u32 %s89, 1
        %s190 = sand.u32 %s89, 1
        %s191 = smul.addr %s190, 10
        %s192 = scalar_lea.vmem [#allocation2], %s191
        %s193 = smul.u32 5, %s18
        %s194 = ssub.s32 9, %s193
        %p195 = scmp.lt.s32.totalorder %s194, 5
        %s196 = scalar_select %p195, %s194, 5
        %p197 = scmp.lt.s32.totalorder %s193, 8
        %s198 = scalar_select %p197, %s193, 8
        %s199 = scalar_lea.vmem %s0, %s198
        %s200 = smul.u32 5, %s18
        %s201 = ssub.s32 9, %s200
        %p202 = scmp.lt.s32.totalorder %s201, 5
        %s203 = scalar_select %p202, %s201, 5
        %s204 = smul.u32 5, %s18
        %s205 = ssub.s32 9, %s204
        %p206 = scmp.lt.s32.totalorder %s205, 5
        %s207 = scalar_select %p206, %s205, 5
        %s208 = smul.u32 2, %s207
        %p209 = scmp.lt.s32.totalorder %s17, 0
        %s210 = scalar_select %p209, %s17, 0
        %p211 = scmp.lt.s32.totalorder %s204, 8
        %s212 = scalar_select %p211, %s204, 8
        %s213 = smul.addr %s210, 9
        %s214 = sadd.s32 %s212, %s213
        %s215 = smul.addr %s214, 2
        %s216 = scalar_lea.vmem %s1, %s215
        %s217 = smul.u32 5, %s18
        %s218 = ssub.s32 9, %s217
        %p219 = scmp.lt.s32.totalorder %s218, 5
        %s220 = scalar_select %p219, %s218, 5
        %s221 = smul.u32 2, %s220
        %s222 = smul.u32 5, %s18
        %s223 = ssub.s32 9, %s222
        %p224 = scmp.lt.s32.totalorder %s223, 5
        %s225 = scalar_select %p224, %s223, 5
        %s226 = smul.u32 2, %s225
        %v227 = vld [vmem:[%s216] sm:$0xff]
        %v228 = vld [vmem:[%s216 + $0x8] sm:$0x3]
        %v229 = vld [vmem:[%s199] sm:$0x1f]
        %v230 = vmax.f32 %v229, 0.0
        %v232 = vperm.slane %v230, 0
        %v233 = vperm.slane %v230, 1
        %v234 = vperm.slane %v230, 2
        %v235 = vperm.slane %v230, 3
        %v236 = vperm.slane %v230, 4
        %v238 = vrot.slane %v233, 6
        %v239 = vrot.slane %v234, 4
        %v240 = vrot.slane %v235, 2
        %vm241 = vcmask 1041408
        %v242 = vsel %vm241, %v232, %v238
        %vm243 = vcmask 1045508
        %v244 = vsel %vm243, %v239, %v240
        %vm245 = vcmask 1043456
        %v246 = vsel %vm245, %v242, %v244
        %v248 = vmul.f32 %v227, %v246
        %v249 = vmul.f32 %v228, %v236
        %250 = vst [vmem:[%s192] sm:$0xff] %v248
        %251 = vst [vmem:[%s192 + $0x8] sm:$0x3] %v249
        %s252 = sand.u32 %s89, 1
        %s253 = sand.u32 %s89, 1
        %s254 = smul.addr %s253, 10
        %s255 = scalar_lea.vmem [#allocation2], %s254
        // Predicated region
        $region29: #{adaptive_layer_spectrum.1} parent=27 // pred_check
          %p256 = pneg %p99
        $region30: #{adaptive_layer_spectrum.1} parent=27 // pred_check_branch
          %258 = sbr.rel (%p256) target = $region32
        $region31: #{adaptive_layer_spectrum.1} parent=27 // pred_region
          %s259 = smul.u32 5, %s18
          %s260 = ssub.s32 9, %s259
          %p261 = scmp.lt.s32.totalorder %s260, 5
          %s262 = scalar_select %p261, %s260, 5
          %s263 = smul.u32 2, %s262
          %p264 = scmp.ne.s32.totalorder 0, %s263
          %s265 = smul.addr %s17, 9
          %s266 = sadd.s32 %s259, %s265
          %s267 = smul.addr %s266, 2
          %s268 = scalar_lea.vmem %s2, %s267
          %s269 = smul.u32 %s262, 2
          // Predicated region
          $region33: #{adaptive_layer_spectrum.1} parent=31 // pred_check
            %p270 = pneg %p264
          $region34: #{adaptive_layer_spectrum.1} parent=31 // pred_check_branch
            %272 = sbr.rel (%p270) target = $region36
          $region35: #{adaptive_layer_spectrum.1} parent=31 // pred_region
            %p273 = scmp.lt.u32.totalorder %s269, 8
            %p274 = pneg %p273
            // Predicated region
            $region37: #{adaptive_layer_spectrum.1} parent=35 // pred_check
              _
            $region38: #{adaptive_layer_spectrum.1} parent=35 // pred_check_branch
              %276 = sbr.rel (%p273) target = $region40
            $region39: #{adaptive_layer_spectrum.1} parent=35 // pred_region
              %s292 = sand.u32 %s269, 7
              %p293 = scmp.eq.s32.totalorder %s292, 0
              // Predicated region
              $region52: #{adaptive_layer_spectrum.1} parent=39 // pred_check
                %p294 = pneg %p293
              $region53: #{adaptive_layer_spectrum.1} parent=39 // pred_check_branch
                %296 = sbr.rel (%p294) target = $region55
              $region54: #{adaptive_layer_spectrum.1} parent=39 // pred_region
                %s297 = sshrl.u32 %s269, 3
                %s298 = sshrl.u32 %s297, 5
                // While loop
                $region56: #{adaptive_layer_spectrum.1} parent=54 // loop_pre_header
                  _
                $region57: #{adaptive_layer_spectrum.1} parent=54 // loop_header
                  %s300 = sphi 0, %s302
                  %p301 = scmp.ge.s32.totalorder %s300, %s298
                  %s305 = sphi 0, %s374
                  %s306 = sphi %s255, %s377
                  %s307 = sphi %s268, %s378
                $region58: #{adaptive_layer_spectrum.1} parent=54 // loop_header_branch
                  %304 = sbr.rel (%p301) target = $region62
                $region59: #{adaptive_layer_spectrum.1} parent=54 // loop_body
                  %v308 = vld [vmem:[%s306] sm:$0xff]
                  %309 = vst [vmem:[%s307] sm:$0xff] %v308
                  %v310 = vld [vmem:[%s306 + $0x8] sm:$0xff]
                  %311 = vst [vmem:[%s307 + $0x8] sm:$0xff] %v310
                  %v312 = vld [vmem:[%s306 + $0x10] sm:$0xff]
                  %313 = vst [vmem:[%s307 + $0x10] sm:$0xff] %v312
                  %v314 = vld [vmem:[%s306 + $0x18] sm:$0xff]
                  %315 = vst [vmem:[%s307 + $0x18] sm:$0xff] %v314
                  %v316 = vld [vmem:[%s306 + $0x20] sm:$0xff]
                  %317 = vst [vmem:[%s307 + $0x20] sm:$0xff] %v316
                  %v318 = vld [vmem:[%s306 + $0x28] sm:$0xff]
                  %319 = vst [vmem:[%s307 + $0x28] sm:$0xff] %v318
                  %v320 = vld [vmem:[%s306 + $0x30] sm:$0xff]
                  %321 = vst [vmem:[%s307 + $0x30] sm:$0xff] %v320
                  %v322 = vld [vmem:[%s306 + $0x38] sm:$0xff]
                  %323 = vst [vmem:[%s307 + $0x38] sm:$0xff] %v322
                  %v324 = vld [vmem:[%s306 + $0x40] sm:$0xff]
                  %325 = vst [vmem:[%s307 + $0x40] sm:$0xff] %v324
                  %v326 = vld [vmem:[%s306 + $0x48] sm:$0xff]
                  %327 = vst [vmem:[%s307 + $0x48] sm:$0xff] %v326
                  %v328 = vld [vmem:[%s306 + $0x50] sm:$0xff]
                  %329 = vst [vmem:[%s307 + $0x50] sm:$0xff] %v328
                  %v330 = vld [vmem:[%s306 + $0x58] sm:$0xff]
                  %331 = vst [vmem:[%s307 + $0x58] sm:$0xff] %v330
                  %v332 = vld [vmem:[%s306 + $0x60] sm:$0xff]
                  %333 = vst [vmem:[%s307 + $0x60] sm:$0xff] %v332
                  %v334 = vld [vmem:[%s306 + $0x68] sm:$0xff]
                  %335 = vst [vmem:[%s307 + $0x68] sm:$0xff] %v334
                  %v336 = vld [vmem:[%s306 + $0x70] sm:$0xff]
                  %337 = vst [vmem:[%s307 + $0x70] sm:$0xff] %v336
                  %v338 = vld [vmem:[%s306 + $0x78] sm:$0xff]
                  %339 = vst [vmem:[%s307 + $0x78] sm:$0xff] %v338
                  %v340 = vld [vmem:[%s306 + $0x80] sm:$0xff]
                  %341 = vst [vmem:[%s307 + $0x80] sm:$0xff] %v340
                  %v342 = vld [vmem:[%s306 + $0x88] sm:$0xff]
                  %343 = vst [vmem:[%s307 + $0x88] sm:$0xff] %v342
                  %v344 = vld [vmem:[%s306 + $0x90] sm:$0xff]
                  %345 = vst [vmem:[%s307 + $0x90] sm:$0xff] %v344
                  %v346 = vld [vmem:[%s306 + $0x98] sm:$0xff]
                  %347 = vst [vmem:[%s307 + $0x98] sm:$0xff] %v346
                  %v348 = vld [vmem:[%s306 + $0xa0] sm:$0xff]
                  %349 = vst [vmem:[%s307 + $0xa0] sm:$0xff] %v348
                  %v350 = vld [vmem:[%s306 + $0xa8] sm:$0xff]
                  %351 = vst [vmem:[%s307 + $0xa8] sm:$0xff] %v350
                  %v352 = vld [vmem:[%s306 + $0xb0] sm:$0xff]
                  %353 = vst [vmem:[%s307 + $0xb0] sm:$0xff] %v352
                  %v354 = vld [vmem:[%s306 + $0xb8] sm:$0xff]
                  %355 = vst [vmem:[%s307 + $0xb8] sm:$0xff] %v354
                  %v356 = vld [vmem:[%s306 + $0xc0] sm:$0xff]
                  %357 = vst [vmem:[%s307 + $0xc0] sm:$0xff] %v356
                  %v358 = vld [vmem:[%s306 + $0xc8] sm:$0xff]
                  %359 = vst [vmem:[%s307 + $0xc8] sm:$0xff] %v358
                  %v360 = vld [vmem:[%s306 + $0xd0] sm:$0xff]
                  %361 = vst [vmem:[%s307 + $0xd0] sm:$0xff] %v360
                  %v362 = vld [vmem:[%s306 + $0xd8] sm:$0xff]
                  %363 = vst [vmem:[%s307 + $0xd8] sm:$0xff] %v362
                  %v364 = vld [vmem:[%s306 + $0xe0] sm:$0xff]
                  %365 = vst [vmem:[%s307 + $0xe0] sm:$0xff] %v364
                  %v366 = vld [vmem:[%s306 + $0xe8] sm:$0xff]
                  %367 = vst [vmem:[%s307 + $0xe8] sm:$0xff] %v366
                  %v368 = vld [vmem:[%s306 + $0xf0] sm:$0xff]
                  %369 = vst [vmem:[%s307 + $0xf0] sm:$0xff] %v368
                  %v370 = vld [vmem:[%s306 + $0xf8] sm:$0xff]
                  %371 = vst [vmem:[%s307 + $0xf8] sm:$0xff] %v370
                  %s372 = sadd.s32 1, %s305
                  %p373 = scmp.ge.s32.totalorder %s372, %s298
                  %s374 = scalar_select %p373, 0, %s372
                  %s375 = smul.u32 %s374, 256
                  %s376 = smul.u32 %s374, 256
                  %s377 = scalar_lea.vmem %s255, %s375 [#allocation2]
                  %s378 = scalar_lea.vmem %s268, %s376
                $region60: #{adaptive_layer_spectrum.1} parent=54 // loop_footer
                  %s302 = sadd.s32 %s300, 1
                $region61: #{adaptive_layer_spectrum.1} parent=54 // loop_footer_branch
                  %299 = sbr.rel target = $region57
                $region62: #{adaptive_layer_spectrum.1} parent=54 // loop_exit
                  _
                %s379 = sshrl.u32 %s297, 5
                %s380 = sand.u32 %s297, 31
                %s381 = smul.u32 %s379, 32
                %s382 = smul.u32 8, %s381
                %s383 = scalar_lea.vmem %s255, %s382 [#allocation2]
                %s384 = smul.u32 8, %s381
                %s385 = scalar_lea.vmem %s268, %s384
                // While loop
                $region63: #{adaptive_layer_spectrum.1} parent=54 // loop_pre_header
                  _
                $region64: #{adaptive_layer_spectrum.1} parent=54 // loop_header
                  %s387 = sphi 0, %s389
                  %p388 = scmp.ge.s32.totalorder %s387, %s380
                  %s392 = sphi 0, %s399
                  %s393 = sphi %s383, %s402
                  %s394 = sphi %s385, %s403
                $region65: #{adaptive_layer_spectrum.1} parent=54 // loop_header_branch
                  %391 = sbr.rel (%p388) target = $region69
                $region66: #{adaptive_layer_spectrum.1} parent=54 // loop_body
                  %v395 = vld [vmem:[%s393] sm:$0xff]
                  %396 = vst [vmem:[%s394] sm:$0xff] %v395
                  %s397 = sadd.s32 1, %s392
                  %p398 = scmp.ge.s32.totalorder %s397, %s380
                  %s399 = scalar_select %p398, 0, %s397
                  %s400 = smul.u32 %s399, 8
                  %s401 = smul.u32 %s399, 8
                  %s402 = scalar_lea.vmem %s383, %s400 [#allocation2]
                  %s403 = scalar_lea.vmem %s385, %s401
                $region67: #{adaptive_layer_spectrum.1} parent=54 // loop_footer
                  %s389 = sadd.s32 %s387, 1
                $region68: #{adaptive_layer_spectrum.1} parent=54 // loop_footer_branch
                  %386 = sbr.rel target = $region64
                $region69: #{adaptive_layer_spectrum.1} parent=54 // loop_exit
                  _
              $region55: #{adaptive_layer_spectrum.1} parent=39 // pred_fallthru
                _
              %p404 = pneg %p293
              // Predicated region
              $region70: #{adaptive_layer_spectrum.1} parent=39 // pred_check
                _
              $region71: #{adaptive_layer_spectrum.1} parent=39 // pred_check_branch
                %406 = sbr.rel (%p293) target = $region73
              $region72: #{adaptive_layer_spectrum.1} parent=39 // pred_region
                %s407 = sand.u32 %s269, 7
                %s408 = ssub.s32 %s269, %s407
                %s409 = scalar_lea.vmem %s255, %s408 [#allocation2]
                %s410 = ssub.s32 %s269, %s407
                %s411 = scalar_lea.vmem %s268, %s410
                %s412 = sshrl.u32 %s269, 3
                %s413 = sshrl.u32 %s412, 5
                // While loop
                $region74: #{adaptive_layer_spectrum.1} parent=72 // loop_pre_header
                  _
                $region75: #{adaptive_layer_spectrum.1} parent=72 // loop_header
                  %s415 = sphi 0, %s417
                  %p416 = scmp.ge.s32.totalorder %s415, %s413
                  %s420 = sphi 0, %s489
                  %s421 = sphi %s255, %s492
                  %s422 = sphi %s268, %s493
                $region76: #{adaptive_layer_spectrum.1} parent=72 // loop_header_branch
                  %419 = sbr.rel (%p416) target = $region80
                $region77: #{adaptive_layer_spectrum.1} parent=72 // loop_body
                  %v423 = vld [vmem:[%s421] sm:$0xff]
                  %424 = vst [vmem:[%s422] sm:$0xff] %v423
                  %v425 = vld [vmem:[%s421 + $0x8] sm:$0xff]
                  %426 = vst [vmem:[%s422 + $0x8] sm:$0xff] %v425
                  %v427 = vld [vmem:[%s421 + $0x10] sm:$0xff]
                  %428 = vst [vmem:[%s422 + $0x10] sm:$0xff] %v427
                  %v429 = vld [vmem:[%s421 + $0x18] sm:$0xff]
                  %430 = vst [vmem:[%s422 + $0x18] sm:$0xff] %v429
                  %v431 = vld [vmem:[%s421 + $0x20] sm:$0xff]
                  %432 = vst [vmem:[%s422 + $0x20] sm:$0xff] %v431
                  %v433 = vld [vmem:[%s421 + $0x28] sm:$0xff]
                  %434 = vst [vmem:[%s422 + $0x28] sm:$0xff] %v433
                  %v435 = vld [vmem:[%s421 + $0x30] sm:$0xff]
                  %436 = vst [vmem:[%s422 + $0x30] sm:$0xff] %v435
                  %v437 = vld [vmem:[%s421 + $0x38] sm:$0xff]
                  %438 = vst [vmem:[%s422 + $0x38] sm:$0xff] %v437
                  %v439 = vld [vmem:[%s421 + $0x40] sm:$0xff]
                  %440 = vst [vmem:[%s422 + $0x40] sm:$0xff] %v439
                  %v441 = vld [vmem:[%s421 + $0x48] sm:$0xff]
                  %442 = vst [vmem:[%s422 + $0x48] sm:$0xff] %v441
                  %v443 = vld [vmem:[%s421 + $0x50] sm:$0xff]
                  %444 = vst [vmem:[%s422 + $0x50] sm:$0xff] %v443
                  %v445 = vld [vmem:[%s421 + $0x58] sm:$0xff]
                  %446 = vst [vmem:[%s422 + $0x58] sm:$0xff] %v445
                  %v447 = vld [vmem:[%s421 + $0x60] sm:$0xff]
                  %448 = vst [vmem:[%s422 + $0x60] sm:$0xff] %v447
                  %v449 = vld [vmem:[%s421 + $0x68] sm:$0xff]
                  %450 = vst [vmem:[%s422 + $0x68] sm:$0xff] %v449
                  %v451 = vld [vmem:[%s421 + $0x70] sm:$0xff]
                  %452 = vst [vmem:[%s422 + $0x70] sm:$0xff] %v451
                  %v453 = vld [vmem:[%s421 + $0x78] sm:$0xff]
                  %454 = vst [vmem:[%s422 + $0x78] sm:$0xff] %v453
                  %v455 = vld [vmem:[%s421 + $0x80] sm:$0xff]
                  %456 = vst [vmem:[%s422 + $0x80] sm:$0xff] %v455
                  %v457 = vld [vmem:[%s421 + $0x88] sm:$0xff]
                  %458 = vst [vmem:[%s422 + $0x88] sm:$0xff] %v457
                  %v459 = vld [vmem:[%s421 + $0x90] sm:$0xff]
                  %460 = vst [vmem:[%s422 + $0x90] sm:$0xff] %v459
                  %v461 = vld [vmem:[%s421 + $0x98] sm:$0xff]
                  %462 = vst [vmem:[%s422 + $0x98] sm:$0xff] %v461
                  %v463 = vld [vmem:[%s421 + $0xa0] sm:$0xff]
                  %464 = vst [vmem:[%s422 + $0xa0] sm:$0xff] %v463
                  %v465 = vld [vmem:[%s421 + $0xa8] sm:$0xff]
                  %466 = vst [vmem:[%s422 + $0xa8] sm:$0xff] %v465
                  %v467 = vld [vmem:[%s421 + $0xb0] sm:$0xff]
                  %468 = vst [vmem:[%s422 + $0xb0] sm:$0xff] %v467
                  %v469 = vld [vmem:[%s421 + $0xb8] sm:$0xff]
                  %470 = vst [vmem:[%s422 + $0xb8] sm:$0xff] %v469
                  %v471 = vld [vmem:[%s421 + $0xc0] sm:$0xff]
                  %472 = vst [vmem:[%s422 + $0xc0] sm:$0xff] %v471
                  %v473 = vld [vmem:[%s421 + $0xc8] sm:$0xff]
                  %474 = vst [vmem:[%s422 + $0xc8] sm:$0xff] %v473
                  %v475 = vld [vmem:[%s421 + $0xd0] sm:$0xff]
                  %476 = vst [vmem:[%s422 + $0xd0] sm:$0xff] %v475
                  %v477 = vld [vmem:[%s421 + $0xd8] sm:$0xff]
                  %478 = vst [vmem:[%s422 + $0xd8] sm:$0xff] %v477
                  %v479 = vld [vmem:[%s421 + $0xe0] sm:$0xff]
                  %480 = vst [vmem:[%s422 + $0xe0] sm:$0xff] %v479
                  %v481 = vld [vmem:[%s421 + $0xe8] sm:$0xff]
                  %482 = vst [vmem:[%s422 + $0xe8] sm:$0xff] %v481
                  %v483 = vld [vmem:[%s421 + $0xf0] sm:$0xff]
                  %484 = vst [vmem:[%s422 + $0xf0] sm:$0xff] %v483
                  %v485 = vld [vmem:[%s421 + $0xf8] sm:$0xff]
                  %486 = vst [vmem:[%s422 + $0xf8] sm:$0xff] %v485
                  %s487 = sadd.s32 1, %s420
                  %p488 = scmp.ge.s32.totalorder %s487, %s413
                  %s489 = scalar_select %p488, 0, %s487
                  %s490 = smul.u32 %s489, 256
                  %s491 = smul.u32 %s489, 256
                  %s492 = scalar_lea.vmem %s255, %s490 [#allocation2]
                  %s493 = scalar_lea.vmem %s268, %s491
                $region78: #{adaptive_layer_spectrum.1} parent=72 // loop_footer
                  %s417 = sadd.s32 %s415, 1
                $region79: #{adaptive_layer_spectrum.1} parent=72 // loop_footer_branch
                  %414 = sbr.rel target = $region75
                $region80: #{adaptive_layer_spectrum.1} parent=72 // loop_exit
                  _
                %s494 = sshrl.u32 %s412, 5
                %s495 = sand.u32 %s412, 31
                %s496 = smul.u32 %s494, 32
                %s497 = smul.u32 8, %s496
                %s498 = scalar_lea.vmem %s255, %s497 [#allocation2]
                %s499 = smul.u32 8, %s496
                %s500 = scalar_lea.vmem %s268, %s499
                // While loop
                $region81: #{adaptive_layer_spectrum.1} parent=72 // loop_pre_header
                  _
                $region82: #{adaptive_layer_spectrum.1} parent=72 // loop_header
                  %s502 = sphi 0, %s504
                  %p503 = scmp.ge.s32.totalorder %s502, %s495
                  %s507 = sphi 0, %s514
                  %s508 = sphi %s498, %s517
                  %s509 = sphi %s500, %s518
                $region83: #{adaptive_layer_spectrum.1} parent=72 // loop_header_branch
                  %506 = sbr.rel (%p503) target = $region87
                $region84: #{adaptive_layer_spectrum.1} parent=72 // loop_body
                  %v510 = vld [vmem:[%s508] sm:$0xff]
                  %511 = vst [vmem:[%s509] sm:$0xff] %v510
                  %s512 = sadd.s32 1, %s507
                  %p513 = scmp.ge.s32.totalorder %s512, %s495
                  %s514 = scalar_select %p513, 0, %s512
                  %s515 = smul.u32 %s514, 8
                  %s516 = smul.u32 %s514, 8
                  %s517 = scalar_lea.vmem %s498, %s515 [#allocation2]
                  %s518 = scalar_lea.vmem %s500, %s516
                $region85: #{adaptive_layer_spectrum.1} parent=72 // loop_footer
                  %s504 = sadd.s32 %s502, 1
                $region86: #{adaptive_layer_spectrum.1} parent=72 // loop_footer_branch
                  %501 = sbr.rel target = $region82
                $region87: #{adaptive_layer_spectrum.1} parent=72 // loop_exit
                  _
                %s519 = sshll.u32 1, %s407
                %s520 = ssub.s32 %s519, 1
                loop: start=0, step=1, limit=1
                $region88: #{adaptive_layer_spectrum.1} parent=72 // loop_pre_header
                  _
                $region89: #{adaptive_layer_spectrum.1} parent=72 // loop_header
                  %s522 = sphi 0, %s526
                  %p523 = scmp.ge.s32.totalorder %s522, 1
                  %s527 = sphi %s409, %s409
                  %s528 = sphi %s411, %s411
                $region90: #{adaptive_layer_spectrum.1} parent=72 // loop_header_branch
                  %525 = sbr.rel (%p523) target = $region94
                $region91: #{adaptive_layer_spectrum.1} parent=72 // loop_body
                  %v529 = vld [vmem:[%s527] sm:%s520]
                  %530 = vst [vmem:[%s528] sm:%s520] %v529
                $region92: #{adaptive_layer_spectrum.1} parent=72 // loop_footer
                  %s526 = sadd.s32 1, %s522
                $region93: #{adaptive_layer_spectrum.1} parent=72 // loop_footer_branch
                  %521 = sbr.rel target = $region89
                $region94: #{adaptive_layer_spectrum.1} parent=72 // loop_exit
                  _
              $region73: #{adaptive_layer_spectrum.1} parent=39 // pred_fallthru
                _
            $region40: #{adaptive_layer_spectrum.1} parent=35 // pred_fallthru
              _
            // Predicated region
            $region41: #{adaptive_layer_spectrum.1} parent=35 // pred_check
              %p277 = pneg %p273
            $region42: #{adaptive_layer_spectrum.1} parent=35 // pred_check_branch
              %279 = sbr.rel (%p277) target = $region44
            $region43: #{adaptive_layer_spectrum.1} parent=35 // pred_region
              %s280 = sshll.u32 1, %s269
              %s281 = ssub.s32 %s280, 1
              loop: start=0, step=1, limit=1
              $region45: #{adaptive_layer_spectrum.1} parent=43 // loop_pre_header
                _
              $region46: #{adaptive_layer_spectrum.1} parent=43 // loop_header
                %s283 = sphi 0, %s287
                %p284 = scmp.ge.s32.totalorder %s283, 1
                %s288 = sphi %s255, %s255
                %s289 = sphi %s268, %s268
              $region47: #{adaptive_layer_spectrum.1} parent=43 // loop_header_branch
                %286 = sbr.rel (%p284) target = $region51
              $region48: #{adaptive_layer_spectrum.1} parent=43 // loop_body
                %v290 = vld [vmem:[%s288] sm:%s281]
                %291 = vst [vmem:[%s289] sm:%s281] %v290
              $region49: #{adaptive_layer_spectrum.1} parent=43 // loop_footer
                %s287 = sadd.s32 1, %s283
              $region50: #{adaptive_layer_spectrum.1} parent=43 // loop_footer_branch
                %282 = sbr.rel target = $region46
              $region51: #{adaptive_layer_spectrum.1} parent=43 // loop_exit
                _
            $region44: #{adaptive_layer_spectrum.1} parent=35 // pred_fallthru
              _
          $region36: #{adaptive_layer_spectrum.1} parent=31 // pred_fallthru
            _
          %531 = vnop
        $region32: #{adaptive_layer_spectrum.1} parent=27 // pred_fallthru
          _
      $region28: #{adaptive_layer_spectrum.1} parent=5 // pred_fallthru
        _
      %p532 = scmp.le.s32.totalorder 2, %s8
      // Predicated region
      $region95: #{adaptive_layer_spectrum.1} parent=5 // pred_check
        %p533 = pneg %p532
      $region96: #{adaptive_layer_spectrum.1} parent=5 // pred_check_branch
        %535 = sbr.rel (%p533) target = $region98
      $region97: #{adaptive_layer_spectrum.1} parent=5 // pred_region
        %s536 = ssub.s32 %s8, 2
        // Predicated region
        $region99: #{adaptive_layer_spectrum.1} parent=97 // pred_check
          %p537 = pneg %p105
        $region100: #{adaptive_layer_spectrum.1} parent=97 // pred_check_branch
          %539 = sbr.rel (%p537) target = $region102
        $region101: #{adaptive_layer_spectrum.1} parent=97 // pred_region
          %s540 = sand.u32 %s90, 1
          %s541 = sand.u32 %s90, 1
          %s542 = smul.addr %s541, 10
          %s543 = scalar_lea.vmem [#allocation2], %s542
        $region102: #{adaptive_layer_spectrum.1} parent=97 // pred_fallthru
          _
      $region98: #{adaptive_layer_spectrum.1} parent=5 // pred_fallthru
        _
    $region6: #{adaptive_layer_spectrum.1} parent=1 // loop_footer
      %s12 = sadd.s32 1, %s8
    $region7: #{adaptive_layer_spectrum.1} parent=1 // loop_footer_branch
      %7 = sbr.rel target = $region3
    $region8: #{adaptive_layer_spectrum.1} parent=1 // loop_exit
      _

// kernel: reverse.0
$region0: #{reverse.0}
  %s0 = inlined_call_operand.vmem [shape: f32[2,4,16,7], index: 0, kind: input, shape index: {}]
  %s1 = inlined_call_operand.vmem [shape: f32[2,4,16,7], index: 1, kind: output, shape index: {}]
  $region1: #{reverse.0} parent=0
    #allocation0 [shape = 'u8[65536]{0}', space=vmem, size = 0x10000, scoped, tag = 'operand span for operand 0']
    #allocation1 [shape = 'u8[32768]{0}', space=vmem, size = 0x8000, scoped, tag = 'operand span for operand 1']
    %s2 = scalar_lea.vmem [#allocation0], 8
    // Predicated region
    $region2: #{reverse.0} parent=1 // pred_check
      _
    $region3: #{reverse.0} parent=1 // pred_check_branch
      %4 = sbr.rel (0) target = $region5
    $region4: #{reverse.0} parent=1 // pred_region
      // Predicated region
      $region6: #{reverse.0} parent=4 // pred_check
        _
      $region7: #{reverse.0} parent=4 // pred_check_branch
        %6 = sbr.rel (0) target = $region9
      $region8: #{reverse.0} parent=4 // pred_region
        // Predicated region
        $region21: #{reverse.0} parent=8 // pred_check
          _
        $region22: #{reverse.0} parent=8 // pred_check_branch
          %36 = sbr.rel (0) target = $region24
        $region23: #{reverse.0} parent=8 // pred_region
          loop: start=0, step=1, limit=1
          $region25: #{reverse.0} parent=23 // loop_pre_header
            _
          $region26: #{reverse.0} parent=23 // loop_header
            %s38 = sphi 0, %s42
            %p39 = scmp.ge.s32.totalorder %s38, 1
            %s43 = sphi %s0, %s0
            %s44 = sphi %s2, %s2
          $region27: #{reverse.0} parent=23 // loop_header_branch
            %41 = sbr.rel (%p39) target = $region31
          $region28: #{reverse.0} parent=23 // loop_body
            %v45 = vld [vmem:[%s43] sm:$0xff]
            %46 = vst [vmem:[%s44] sm:$0xff] %v45
            %v47 = vld [vmem:[%s43 + $0x8] sm:$0xff]
            %48 = vst [vmem:[%s44 + $0x10] sm:$0xff] %v47
            %v49 = vld [vmem:[%s43 + $0x10] sm:$0xff]
            %50 = vst [vmem:[%s44 + $0x20] sm:$0xff] %v49
            %v51 = vld [vmem:[%s43 + $0x18] sm:$0xff]
            %52 = vst [vmem:[%s44 + $0x30] sm:$0xff] %v51
            %v53 = vld [vmem:[%s43 + $0x20] sm:$0xff]
            %54 = vst [vmem:[%s44 + $0x40] sm:$0xff] %v53
            %v55 = vld [vmem:[%s43 + $0x28] sm:$0xff]
            %56 = vst [vmem:[%s44 + $0x50] sm:$0xff] %v55
            %v57 = vld [vmem:[%s43 + $0x30] sm:$0xff]
            %58 = vst [vmem:[%s44 + $0x60] sm:$0xff] %v57
            %v59 = vld [vmem:[%s43 + $0x38] sm:$0xff]
            %60 = vst [vmem:[%s44 + $0x70] sm:$0xff] %v59
          $region29: #{reverse.0} parent=23 // loop_footer
            %s42 = sadd.s32 1, %s38
          $region30: #{reverse.0} parent=23 // loop_footer_branch
            %37 = sbr.rel target = $region26
          $region31: #{reverse.0} parent=23 // loop_exit
            _
        $region24: #{reverse.0} parent=8 // pred_fallthru
          _
        // Predicated region
        $region32: #{reverse.0} parent=8 // pred_check
          _
        $region33: #{reverse.0} parent=8 // pred_check_branch
          %62 = sbr.rel target = $region35
        $region34: #{reverse.0} parent=8 // pred_region
          _
        $region35: #{reverse.0} parent=8 // pred_fallthru
          _
      $region9: #{reverse.0} parent=4 // pred_fallthru
        _
      // Predicated region
      $region10: #{reverse.0} parent=4 // pred_check
        _
      $region11: #{reverse.0} parent=4 // pred_check_branch
        %8 = sbr.rel target = $region13
      $region12: #{reverse.0} parent=4 // pred_region
        %s10 = ssub.s32 256, 1
        loop: start=0, step=1, limit=1
        $region14: #{reverse.0} parent=12 // loop_pre_header
          _
        $region15: #{reverse.0} parent=12 // loop_header
          %s12 = sphi 0, %s16
          %p13 = scmp.ge.s32.totalorder %s12, 1
          %s17 = sphi %s0, %s0
          %s18 = sphi %s2, %s2
        $region16: #{reverse.0} parent=12 // loop_header_branch
          %15 = sbr.rel (%p13) target = $region20
        $region17: #{reverse.0} parent=12 // loop_body
          %v19 = vld [vmem:[%s17] sm:%s10]
          %20 = vst [vmem:[%s18] sm:%s10] %v19
          %v21 = vld [vmem:[%s17 + $0x8] sm:%s10]
          %22 = vst [vmem:[%s18 + $0x10] sm:%s10] %v21
          %v23 = vld [vmem:[%s17 + $0x10] sm:%s10]
          %24 = vst [vmem:[%s18 + $0x20] sm:%s10] %v23
          %v25 = vld [vmem:[%s17 + $0x18] sm:%s10]
          %26 = vst [vmem:[%s18 + $0x30] sm:%s10] %v25
          %v27 = vld [vmem:[%s17 + $0x20] sm:%s10]
          %28 = vst [vmem:[%s18 + $0x40] sm:%s10] %v27
          %v29 = vld [vmem:[%s17 + $0x28] sm:%s10]
          %30 = vst [vmem:[%s18 + $0x50] sm:%s10] %v29
          %v31 = vld [vmem:[%s17 + $0x30] sm:%s10]
          %32 = vst [vmem:[%s18 + $0x60] sm:%s10] %v31
          %v33 = vld [vmem:[%s17 + $0x38] sm:%s10]
          %34 = vst [vmem:[%s18 + $0x70] sm:%s10] %v33
        $region18: #{reverse.0} parent=12 // loop_footer
          %s16 = sadd.s32 1, %s12
        $region19: #{reverse.0} parent=12 // loop_footer_branch
          %11 = sbr.rel target = $region15
        $region20: #{reverse.0} parent=12 // loop_exit
          _
      $region13: #{reverse.0} parent=4 // pred_fallthru
        _
    $region5: #{reverse.0} parent=1 // pred_fallthru
      _
    %63 = vnop
    %s64 = scalar_lea.vmem [#allocation0], 7
    %v65 = vld [vmem:[%s64] ss:$-1 sm:$0xff]
    %v66 = vrot.slane %v65, 1
    %67 = vst [vmem:[#allocation1] sm:$0xff] %v66
    %s68 = scalar_lea.vmem [#allocation0], 8
    %s69 = scalar_lea.vmem %s68, 7 [#allocation0]
    %v70 = vld [vmem:[%s69] ss:$-1 sm:$0xff]
    %v71 = vrot.slane %v70, 1
    %v72 = vlaneseq
    %v73 = vshrl.u32 %v72, 7
    %vm74 = vcmp.lt.s32.totalorder %v73, 7
    %75 = vst.msk [vmem:[#allocation1] sm:$0xff] %vm74, %v71
    %s76 = scalar_lea.vmem [#allocation1], 8
    %s77 = scalar_lea.vmem [#allocation0], 16
    %s78 = scalar_lea.vmem %s77, 7 [#allocation0]
    %v79 = vld [vmem:[%s78] ss:$-1 sm:$0xff]
    %v80 = vrot.slane %v79, 1
    %81 = vst [vmem:[%s76] sm:$0xff] %v80
    %s82 = scalar_lea.vmem %s77, 8 [#allocation0]
    %s83 = scalar_lea.vmem %s82, 7 [#allocation0]
    %v84 = vld [vmem:[%s83] ss:$-1 sm:$0xff]
    %v85 = vrot.slane %v84, 1
    %v86 = vlaneseq
    %v87 = vshrl.u32 %v86, 7
    %vm88 = vcmp.lt.s32.totalorder %v87, 7
    %89 = vst.msk [vmem:[%s76] sm:$0xff] %vm88, %v85
    %s90 = scalar_lea.vmem [#allocation1], 16
    %s91 = scalar_lea.vmem [#allocation0], 32
    %s92 = scalar_lea.vmem %s91, 7 [#allocation0]
    %v93 = vld [vmem:[%s92] ss:$-1 sm:$0xff]
    %v94 = vrot.slane %v93, 1
    %95 = vst [vmem:[%s90] sm:$0xff] %v94
    %s96 = scalar_lea.vmem %s91, 8 [#allocation0]
    %s97 = scalar_lea.vmem %s96, 7 [#allocation0]
    %v98 = vld [vmem:[%s97] ss:$-1 sm:$0xff]
    %v99 = vrot.slane %v98, 1
    %v100 = vlaneseq
    %v101 = vshrl.u32 %v100, 7
    %vm102 = vcmp.lt.s32.totalorder %v101, 7
    %103 = vst.msk [vmem:[%s90] sm:$0xff] %vm102, %v99
    %s104 = scalar_lea.vmem [#allocation1], 24
    %s105 = scalar_lea.vmem [#allocation0], 48
    %s106 = scalar_lea.vmem %s105, 7 [#allocation0]
    %v107 = vld [vmem:[%s106] ss:$-1 sm:$0xff]
    %v108 = vrot.slane %v107, 1
    %109 = vst [vmem:[%s104] sm:$0xff] %v108
    %s110 = scalar_lea.vmem %s105, 8 [#allocation0]
    %s111 = scalar_lea.vmem %s110, 7 [#allocation0]
    %v112 = vld [vmem:[%s111] ss:$-1 sm:$0xff]
    %v113 = vrot.slane %v112, 1
    %v114 = vlaneseq
    %v115 = vshrl.u32 %v114, 7
    %vm116 = vcmp.lt.s32.totalorder %v115, 7
    %117 = vst.msk [vmem:[%s104] sm:$0xff] %vm116, %v113
    %s118 = scalar_lea.vmem [#allocation1], 32
    %s119 = scalar_lea.vmem [#allocation0], 64
    %s120 = scalar_lea.vmem %s119, 7 [#allocation0]
    %v121 = vld [vmem:[%s120] ss:$-1 sm:$0xff]
    %v122 = vrot.slane %v121, 1
    %123 = vst [vmem:[%s118] sm:$0xff] %v122
    %s124 = scalar_lea.vmem %s119, 8 [#allocation0]
    %s125 = scalar_lea.vmem %s124, 7 [#allocation0]
    %v126 = vld [vmem:[%s125] ss:$-1 sm:$0xff]
    %v127 = vrot.slane %v126, 1
    %v128 = vlaneseq
    %v129 = vshrl.u32 %v128, 7
    %vm130 = vcmp.lt.s32.totalorder %v129, 7
    %131 = vst.msk [vmem:[%s118] sm:$0xff] %vm130, %v127
    %s132 = scalar_lea.vmem [#allocation1], 40
    %s133 = scalar_lea.vmem [#allocation0], 80
    %s134 = scalar_lea.vmem %s133, 7 [#allocation0]
    %v135 = vld [vmem:[%s134] ss:$-1 sm:$0xff]
    %v136 = vrot.slane %v135, 1
    %137 = vst [vmem:[%s132] sm:$0xff] %v136
    %s138 = scalar_lea.vmem %s133, 8 [#allocation0]
    %s139 = scalar_lea.vmem %s138, 7 [#allocation0]
    %v140 = vld [vmem:[%s139] ss:$-1 sm:$0xff]
    %v141 = vrot.slane %v140, 1
    %v142 = vlaneseq
    %v143 = vshrl.u32 %v142, 7
    %vm144 = vcmp.lt.s32.totalorder %v143, 7
    %145 = vst.msk [vmem:[%s132] sm:$0xff] %vm144, %v141
    %s146 = scalar_lea.vmem [#allocation1], 48
    %s147 = scalar_lea.vmem [#allocation0], 96
    %s148 = scalar_lea.vmem %s147, 7 [#allocation0]
    %v149 = vld [vmem:[%s148] ss:$-1 sm:$0xff]
    %v150 = vrot.slane %v149, 1
    %151 = vst [vmem:[%s146] sm:$0xff] %v150
    %s152 = scalar_lea.vmem %s147, 8 [#allocation0]
    %s153 = scalar_lea.vmem %s152, 7 [#allocation0]
    %v154 = vld [vmem:[%s153] ss:$-1 sm:$0xff]
    %v155 = vrot.slane %v154, 1
    %v156 = vlaneseq
    %v157 = vshrl.u32 %v156, 7
    %vm158 = vcmp.lt.s32.totalorder %v157, 7
    %159 = vst.msk [vmem:[%s146] sm:$0xff] %vm158, %v155
    %s160 = scalar_lea.vmem [#allocation1], 56
    %s161 = scalar_lea.vmem [#allocation0], 112
    %s162 = scalar_lea.vmem %s161, 7 [#allocation0]
    %v163 = vld [vmem:[%s162] ss:$-1 sm:$0xff]
    %v164 = vrot.slane %v163, 1
    %165 = vst [vmem:[%s160] sm:$0xff] %v164
    %s166 = scalar_lea.vmem %s161, 8 [#allocation0]
    %s167 = scalar_lea.vmem %s166, 7 [#allocation0]
    %v168 = vld [vmem:[%s167] ss:$-1 sm:$0xff]
    %v169 = vrot.slane %v168, 1
    %v170 = vlaneseq
    %v171 = vshrl.u32 %v170, 7
    %vm172 = vcmp.lt.s32.totalorder %v171, 7
    %173 = vst.msk [vmem:[%s160] sm:$0xff] %vm172, %v169
    // Predicated region
    $region36: #{reverse.0} parent=1 // pred_check
      _
    $region37: #{reverse.0} parent=1 // pred_check_branch
      %175 = sbr.rel (0) target = $region39
    $region38: #{reverse.0} parent=1 // pred_region
      // Predicated region
      $region40: #{reverse.0} parent=38 // pred_check
        _
      $region41: #{reverse.0} parent=38 // pred_check_branch
        %177 = sbr.rel (0) target = $region43
      $region42: #{reverse.0} parent=38 // pred_region
        // Predicated region
        $region55: #{reverse.0} parent=42 // pred_check
          _
        $region56: #{reverse.0} parent=42 // pred_check_branch
          %207 = sbr.rel (0) target = $region58
        $region57: #{reverse.0} parent=42 // pred_region
          loop: start=0, step=1, limit=1
          $region59: #{reverse.0} parent=57 // loop_pre_header
            _
          $region60: #{reverse.0} parent=57 // loop_header
            %s209 = sphi 0, %s213
            %p210 = scmp.ge.s32.totalorder %s209, 1
            %s214 = sphi [#allocation1], [#allocation1]
            %s215 = sphi %s1, %s1
          $region61: #{reverse.0} parent=57 // loop_header_branch
            %212 = sbr.rel (%p210) target = $region65
          $region62: #{reverse.0} parent=57 // loop_body
            %v216 = vld [vmem:[%s214] sm:$0xff]
            %217 = vst [vmem:[%s215] sm:$0xff] %v216
            %v218 = vld [vmem:[%s214 + $0x8] sm:$0xff]
            %219 = vst [vmem:[%s215 + $0x8] sm:$0xff] %v218
            %v220 = vld [vmem:[%s214 + $0x10] sm:$0xff]
            %221 = vst [vmem:[%s215 + $0x10] sm:$0xff] %v220
            %v222 = vld [vmem:[%s214 + $0x18] sm:$0xff]
            %223 = vst [vmem:[%s215 + $0x18] sm:$0xff] %v222
            %v224 = vld [vmem:[%s214 + $0x20] sm:$0xff]
            %225 = vst [vmem:[%s215 + $0x20] sm:$0xff] %v224
            %v226 = vld [vmem:[%s214 + $0x28] sm:$0xff]
            %227 = vst [vmem:[%s215 + $0x28] sm:$0xff] %v226
            %v228 = vld [vmem:[%s214 + $0x30] sm:$0xff]
            %229 = vst [vmem:[%s215 + $0x30] sm:$0xff] %v228
            %v230 = vld [vmem:[%s214 + $0x38] sm:$0xff]
            %231 = vst [vmem:[%s215 + $0x38] sm:$0xff] %v230
          $region63: #{reverse.0} parent=57 // loop_footer
            %s213 = sadd.s32 1, %s209
          $region64: #{reverse.0} parent=57 // loop_footer_branch
            %208 = sbr.rel target = $region60
          $region65: #{reverse.0} parent=57 // loop_exit
            _
        $region58: #{reverse.0} parent=42 // pred_fallthru
          _
        // Predicated region
        $region66: #{reverse.0} parent=42 // pred_check
          _
        $region67: #{reverse.0} parent=42 // pred_check_branch
          %233 = sbr.rel target = $region69
        $region68: #{reverse.0} parent=42 // pred_region
          _
        $region69: #{reverse.0} parent=42 // pred_fallthru
          _
      $region43: #{reverse.0} parent=38 // pred_fallthru
        _
      // Predicated region
      $region44: #{reverse.0} parent=38 // pred_check
        _
      $region45: #{reverse.0} parent=38 // pred_check_branch
        %179 = sbr.rel target = $region47
      $region46: #{reverse.0} parent=38 // pred_region
        %s181 = ssub.s32 256, 1
        loop: start=0, step=1, limit=1
        $region48: #{reverse.0} parent=46 // loop_pre_header
          _
        $region49: #{reverse.0} parent=46 // loop_header
          %s183 = sphi 0, %s187
          %p184 = scmp.ge.s32.totalorder %s183, 1
          %s188 = sphi [#allocation1], [#allocation1]
          %s189 = sphi %s1, %s1
        $region50: #{reverse.0} parent=46 // loop_header_branch
          %186 = sbr.rel (%p184) target = $region54
        $region51: #{reverse.0} parent=46 // loop_body
          %v190 = vld [vmem:[%s188] sm:%s181]
          %191 = vst [vmem:[%s189] sm:%s181] %v190
          %v192 = vld [vmem:[%s188 + $0x8] sm:%s181]
          %193 = vst [vmem:[%s189 + $0x8] sm:%s181] %v192
          %v194 = vld [vmem:[%s188 + $0x10] sm:%s181]
          %195 = vst [vmem:[%s189 + $0x10] sm:%s181] %v194
          %v196 = vld [vmem:[%s188 + $0x18] sm:%s181]
          %197 = vst [vmem:[%s189 + $0x18] sm:%s181] %v196
          %v198 = vld [vmem:[%s188 + $0x20] sm:%s181]
          %199 = vst [vmem:[%s189 + $0x20] sm:%s181] %v198
          %v200 = vld [vmem:[%s188 + $0x28] sm:%s181]
          %201 = vst [vmem:[%s189 + $0x28] sm:%s181] %v200
          %v202 = vld [vmem:[%s188 + $0x30] sm:%s181]
          %203 = vst [vmem:[%s189 + $0x30] sm:%s181] %v202
          %v204 = vld [vmem:[%s188 + $0x38] sm:%s181]
          %205 = vst [vmem:[%s189 + $0x38] sm:%s181] %v204
        $region52: #{reverse.0} parent=46 // loop_footer
          %s187 = sadd.s32 1, %s183
        $region53: #{reverse.0} parent=46 // loop_footer_branch
          %182 = sbr.rel target = $region49
        $region54: #{reverse.0} parent=46 // loop_exit
          _
      $region47: #{reverse.0} parent=38 // pred_fallthru
        _
    $region39: #{reverse.0} parent=1 // pred_fallthru
      _
    %234 = vnop

</llo_original>
